<compile_context>
chip_gen: v7x
topology: tpu7x:2x2x1
jax: 0.10.0
libtpu: 0.0.40
codegen_flags: <defaults>
</compile_context>

<pallas_src>
import jax
import jax.numpy as jnp
from jax.experimental import pallas as pl
from jax.experimental.pallas import tpu as pltpu


HIDDEN = 256


def _round_up(n, m):
    return ((n + m - 1) // m) * m


def _policy_kernel(ma_ref, x_ref, w1_ref, b1_ref, w2_ref, b2_ref, w3_ref, b3_ref,
                   out_ref):
    max_action = ma_ref[0, 0]                                  # SMEM scalar (f32)

    x = x_ref[...]                                             # (TM, S_pad) bf16

    # Layer 1: bf16 matmul, f32 accumulate, f32 bias/ReLU.
    h1 = jnp.dot(x, w1_ref[...], preferred_element_type=jnp.float32)
    h1 = jnp.maximum(h1 + b1_ref[...], 0.0)                    # (TM, 256) f32

    # Layer 2.
    h2 = jnp.dot(h1.astype(jnp.bfloat16), w2_ref[...],
                 preferred_element_type=jnp.float32)
    h2 = jnp.maximum(h2 + b2_ref[...], 0.0)                    # (TM, 256) f32

    # Layer 3 + tanh epilogue (lane-dense padded output, (TM, A_pad)).
    h3 = jnp.dot(h2.astype(jnp.bfloat16), w3_ref[...],
                 preferred_element_type=jnp.float32) + b3_ref[...]
    out_ref[...] = (max_action * jnp.tanh(h3)).astype(out_ref.dtype)


def policy_forward(state, params, max_action, *, tm_max=512):
    """state: (B, state_dim) float32. params: dict of w1,b1,w2,b2,w3,b3 (f32)."""
    B, S = state.shape
    H = params["w1"].shape[1]
    A = params["w3"].shape[1]

    # Padded geometry: lane-dense contraction and output dims, 8-aligned batch.
    S_pad = _round_up(S, 128)
    A_pad = _round_up(A, 128)
    B8 = _round_up(max(B, 8), 8)
    if B8 <= tm_max:
        TM, B_pad = B8, B8
    else:
        TM = tm_max
        B_pad = _round_up(B8, TM)
    grid = (B_pad // TM,)

    # One-time wrapper-side padding / bf16 casts (weights DMA'd once per call).
    bf16 = jnp.bfloat16
    x_p = jnp.zeros((B_pad, S_pad), bf16).at[:B, :S].set(state.astype(bf16))
    w1_p = jnp.zeros((S_pad, H), bf16).at[:S, :].set(params["w1"].astype(bf16))
    w2_p = params["w2"].astype(bf16)
    w3_p = jnp.zeros((H, A_pad), bf16).at[:, :A].set(params["w3"].astype(bf16))
    b1_p = params["b1"].reshape(1, H).astype(jnp.float32)
    b2_p = params["b2"].reshape(1, H).astype(jnp.float32)
    b3_p = jnp.zeros((1, A_pad), jnp.float32).at[0, :A].set(
        params["b3"].astype(jnp.float32))
    ma = jnp.full((1, 1), float(max_action), jnp.float32)

    flops = 2 * B_pad * (S_pad * H + H * H + H * A_pad)
    bytes_accessed = (
        x_p.size * 2 + w1_p.size * 2 + w2_p.size * 2 + w3_p.size * 2
        + (b1_p.size + b2_p.size + b3_p.size) * 4
        + B_pad * A_pad * 4)

    out_padded = pl.pallas_call(
        _policy_kernel,
        out_shape=jax.ShapeDtypeStruct((B_pad, A_pad), jnp.float32),
        grid=grid,
        in_specs=[
            pl.BlockSpec(memory_space=pltpu.MemorySpace.SMEM),      # max_action
            pl.BlockSpec((TM, S_pad), lambda i: (i, 0)),            # x tile (streams)
            pl.BlockSpec((S_pad, H), lambda i: (0, 0)),             # w1 (pinned)
            pl.BlockSpec((1, H), lambda i: (0, 0)),                 # b1 (pinned)
            pl.BlockSpec((H, H), lambda i: (0, 0)),                 # w2 (pinned)
            pl.BlockSpec((1, H), lambda i: (0, 0)),                 # b2 (pinned)
            pl.BlockSpec((H, A_pad), lambda i: (0, 0)),             # w3 (pinned)
            pl.BlockSpec((1, A_pad), lambda i: (0, 0)),             # b3 (pinned)
        ],
        out_specs=pl.BlockSpec((TM, A_pad), lambda i: (i, 0)),
        compiler_params=pltpu.CompilerParams(
            dimension_semantics=("parallel",)),
        cost_estimate=pl.CostEstimate(
            flops=flops,
            transcendentals=B_pad * A_pad,
            bytes_accessed=bytes_accessed),
    )(ma, x_p, w1_p, b1_p, w2_p, b2_p, w3_p, b3_p)

    return out_padded[:B, :A]


def init_params(key, state_dim, action_dim, hidden=HIDDEN):
    """Deterministic synthetic init (uniform, PyTorch-Linear-like fan-in scaling)."""
    ks = jax.random.split(key, 6)

    def lin(kw, kb, fan_in, fan_out):
        bound = 1.0 / jnp.sqrt(fan_in)
        w = jax.random.uniform(kw, (fan_in, fan_out), jnp.float32, -bound, bound)
        b = jax.random.uniform(kb, (fan_out,), jnp.float32, -bound, bound)
        return w, b

    w1, b1 = lin(ks[0], ks[1], state_dim, hidden)
    w2, b2 = lin(ks[2], ks[3], hidden, hidden)
    w3, b3 = lin(ks[4], ks[5], hidden, action_dim)
    return {"w1": w1, "b1": b1, "w2": w2, "b2": b2, "w3": w3, "b3": b3}


def policy_ref(state, params, max_action):
    """Pure-JAX reference mirroring the kernel's bf16-matmul / f32-accumulate math."""
    def mm(x, w):
        return jnp.dot(x.astype(jnp.bfloat16), w.astype(jnp.bfloat16),
                       preferred_element_type=jnp.float32)
    h = jnp.maximum(mm(state, params["w1"]) + params["b1"], 0.0)
    h = jnp.maximum(mm(h, params["w2"]) + params["b2"], 0.0)
    return max_action * jnp.tanh(mm(h, params["w3"]) + params["b3"])


if __name__ == "__main__":
    key = jax.random.PRNGKey(0)
    k_state, k_params = jax.random.split(key)

    batch, state_dim, action_dim = 8, 17, 6
    max_action = 2.0

    state = jax.random.normal(k_state, (batch, state_dim), jnp.float32)
    params = init_params(k_params, state_dim, action_dim)

    out = policy_forward(state, params, max_action)
    out = jax.block_until_ready(out)

    ref = policy_ref(state, params, max_action)
    assert out.shape == (batch, action_dim)
    assert jnp.allclose(out, ref, atol=2e-2, rtol=2e-2), "mismatch vs JAX reference"

    print("KERNEL_OK")
</pallas_src>

<mosaic_0001>
module attributes {stable_mosaic.version = 11 : i64} {
  func.func @_policy_kernel(%arg0: i32, %arg1: memref<1x1xf32, #tpu.memory_space<smem>>, %arg2: memref<8x128xbf16, #tpu.memory_space<vmem>>, %arg3: memref<128x256xbf16, #tpu.memory_space<vmem>>, %arg4: memref<1x256xf32, #tpu.memory_space<vmem>>, %arg5: memref<256x256xbf16, #tpu.memory_space<vmem>>, %arg6: memref<1x256xf32, #tpu.memory_space<vmem>>, %arg7: memref<256x128xbf16, #tpu.memory_space<vmem>>, %arg8: memref<1x128xf32, #tpu.memory_space<vmem>>, %arg9: memref<8x128xf32, #tpu.memory_space<vmem>>) attributes {dimension_semantics = [#tpu.dimension_semantics<parallel>], iteration_bounds = array<i64: 1>, scalar_prefetch = 0 : i64, scratch_operands = 0 : i64, tpu.core_type = #tpu.core_type<tc>, window_params = [{transform_indices = @transform_0, window_bounds = array<i64: 1, 1>}, {transform_indices = @transform_1, window_bounds = array<i64: 8, 128>}, {pipeline_mode = #tpu.pipeline_mode<synchronous>, transform_indices = @transform_2, window_bounds = array<i64: 128, 256>}, {pipeline_mode = #tpu.pipeline_mode<synchronous>, transform_indices = @transform_3, window_bounds = array<i64: 1, 256>}, {pipeline_mode = #tpu.pipeline_mode<synchronous>, transform_indices = @transform_4, window_bounds = array<i64: 256, 256>}, {pipeline_mode = #tpu.pipeline_mode<synchronous>, transform_indices = @transform_5, window_bounds = array<i64: 1, 256>}, {pipeline_mode = #tpu.pipeline_mode<synchronous>, transform_indices = @transform_6, window_bounds = array<i64: 256, 128>}, {pipeline_mode = #tpu.pipeline_mode<synchronous>, transform_indices = @transform_7, window_bounds = array<i64: 1, 128>}, {transform_indices = @transform_8, window_bounds = array<i64: 8, 128>}]} {
    %c0 = arith.constant 0 : index
    %c0_0 = arith.constant 0 : index
    %0 = memref.load %arg1[%c0, %c0_0] : memref<1x1xf32, #tpu.memory_space<smem>>
    %c0_1 = arith.constant 0 : index
    %c0_2 = arith.constant 0 : index
    %1 = vector.load %arg2[%c0_1, %c0_2] : memref<8x128xbf16, #tpu.memory_space<vmem>>, vector<8x128xbf16>
    %c0_3 = arith.constant 0 : index
    %c0_4 = arith.constant 0 : index
    %2 = vector.load %arg3[%c0_3, %c0_4] : memref<128x256xbf16, #tpu.memory_space<vmem>>, vector<128x256xbf16>
    %cst = arith.constant dense<0.000000e+00> : vector<8x256xf32>
    %3 = tpu.matmul %1, %2, %cst {dimension_numbers = #tpu.dot_dimension_numbers<[1], [0], [0], [1], [0, 0, 1, 1], [], []>} : vector<8x128xbf16>, vector<128x256xbf16>, vector<8x256xf32> -> vector<8x256xf32>
    %c0_5 = arith.constant 0 : index
    %c0_6 = arith.constant 0 : index
    %4 = vector.load %arg4[%c0_5, %c0_6] : memref<1x256xf32, #tpu.memory_space<vmem>>, vector<1x256xf32>
    %5 = vector.broadcast %4 : vector<1x256xf32> to vector<8x256xf32>
    %6 = arith.addf %3, %5 : vector<8x256xf32>
    %cst_7 = arith.constant 0.000000e+00 : f32
    %7 = vector.broadcast %cst_7 : f32 to vector<8x256xf32>
    %8 = arith.maximumf %6, %7 : vector<8x256xf32>
    %9 = arith.truncf %8 : vector<8x256xf32> to vector<8x256xbf16>
    %c0_8 = arith.constant 0 : index
    %c0_9 = arith.constant 0 : index
    %10 = vector.load %arg5[%c0_8, %c0_9] : memref<256x256xbf16, #tpu.memory_space<vmem>>, vector<256x256xbf16>
    %cst_10 = arith.constant dense<0.000000e+00> : vector<8x256xf32>
    %11 = tpu.matmul %9, %10, %cst_10 {dimension_numbers = #tpu.dot_dimension_numbers<[1], [0], [0], [1], [0, 0, 1, 1], [], []>} : vector<8x256xbf16>, vector<256x256xbf16>, vector<8x256xf32> -> vector<8x256xf32>
    %c0_11 = arith.constant 0 : index
    %c0_12 = arith.constant 0 : index
    %12 = vector.load %arg6[%c0_11, %c0_12] : memref<1x256xf32, #tpu.memory_space<vmem>>, vector<1x256xf32>
    %13 = vector.broadcast %12 : vector<1x256xf32> to vector<8x256xf32>
    %14 = arith.addf %11, %13 : vector<8x256xf32>
    %cst_13 = arith.constant 0.000000e+00 : f32
    %15 = vector.broadcast %cst_13 : f32 to vector<8x256xf32>
    %16 = arith.maximumf %14, %15 : vector<8x256xf32>
    %17 = arith.truncf %16 : vector<8x256xf32> to vector<8x256xbf16>
    %c0_14 = arith.constant 0 : index
    %c0_15 = arith.constant 0 : index
    %18 = vector.load %arg7[%c0_14, %c0_15] : memref<256x128xbf16, #tpu.memory_space<vmem>>, vector<256x128xbf16>
    %cst_16 = arith.constant dense<0.000000e+00> : vector<8x128xf32>
    %19 = tpu.matmul %17, %18, %cst_16 {dimension_numbers = #tpu.dot_dimension_numbers<[1], [0], [0], [1], [0, 0, 1, 1], [], []>} : vector<8x256xbf16>, vector<256x128xbf16>, vector<8x128xf32> -> vector<8x128xf32>
    %c0_17 = arith.constant 0 : index
    %c0_18 = arith.constant 0 : index
    %20 = vector.load %arg8[%c0_17, %c0_18] : memref<1x128xf32, #tpu.memory_space<vmem>>, vector<1x128xf32>
    %21 = vector.broadcast %20 : vector<1x128xf32> to vector<8x128xf32>
    %22 = arith.addf %19, %21 : vector<8x128xf32>
    %23 = math.tanh %22 : vector<8x128xf32>
    %24 = vector.broadcast %0 : f32 to vector<8x128xf32>
    %25 = arith.mulf %24, %23 : vector<8x128xf32>
    %c0_19 = arith.constant 0 : index
    %c0_20 = arith.constant 0 : index
    %26 = vector.load %arg9[%c0_19, %c0_20] : memref<8x128xf32, #tpu.memory_space<vmem>>, vector<8x128xf32>
    tpu.vector_store %arg9[%c0_19, %c0_20], %25 {strides = array<i32>} : memref<8x128xf32, #tpu.memory_space<vmem>>, vector<8x128xf32>,
    return
  }
  func.func @transform_0(%arg0: i32) -> (i32, i32) {
    %c0_i32 = arith.constant 0 : i32
    %c0_i32_0 = arith.constant 0 : i32
    %c0_i32_1 = arith.constant 0 : i32
    return %c0_i32, %c0_i32_0 : i32, i32
  }
  func.func @transform_1(%arg0: i32) -> (i32, i32) {
    %c0_i32 = arith.constant 0 : i32
    %c0_i32_0 = arith.constant 0 : i32
    return %arg0, %c0_i32 : i32, i32
  }
  func.func @transform_2(%arg0: i32) -> (i32, i32) {
    %c0_i32 = arith.constant 0 : i32
    %c0_i32_0 = arith.constant 0 : i32
    %c0_i32_1 = arith.constant 0 : i32
    return %c0_i32, %c0_i32_0 : i32, i32
  }
  func.func @transform_3(%arg0: i32) -> (i32, i32) {
    %c0_i32 = arith.constant 0 : i32
    %c0_i32_0 = arith.constant 0 : i32
    %c0_i32_1 = arith.constant 0 : i32
    return %c0_i32, %c0_i32_0 : i32, i32
  }
  func.func @transform_4(%arg0: i32) -> (i32, i32) {
    %c0_i32 = arith.constant 0 : i32
    %c0_i32_0 = arith.constant 0 : i32
    %c0_i32_1 = arith.constant 0 : i32
    return %c0_i32, %c0_i32_0 : i32, i32
  }
  func.func @transform_5(%arg0: i32) -> (i32, i32) {
    %c0_i32 = arith.constant 0 : i32
    %c0_i32_0 = arith.constant 0 : i32
    %c0_i32_1 = arith.constant 0 : i32
    return %c0_i32, %c0_i32_0 : i32, i32
  }
  func.func @transform_6(%arg0: i32) -> (i32, i32) {
    %c0_i32 = arith.constant 0 : i32
    %c0_i32_0 = arith.constant 0 : i32
    %c0_i32_1 = arith.constant 0 : i32
    return %c0_i32, %c0_i32_0 : i32, i32
  }
  func.func @transform_7(%arg0: i32) -> (i32, i32) {
    %c0_i32 = arith.constant 0 : i32
    %c0_i32_0 = arith.constant 0 : i32
    %c0_i32_1 = arith.constant 0 : i32
    return %c0_i32, %c0_i32_0 : i32, i32
  }
  func.func @transform_8(%arg0: i32) -> (i32, i32) {
    %c0_i32 = arith.constant 0 : i32
    %c0_i32_0 = arith.constant 0 : i32
    return %arg0, %c0_i32 : i32, i32
  }
}

</mosaic_0001>

<llo_original>
// kernel: tpu_custom_call.1
$region0: #{tpu_custom_call.1}
  #allocation0 [shape = 'u32[]', space=smem, size = 0x4, offset = 0x4, fixed_abs, tag = 'smem constant byte address 0x4 - core index']
  #allocation1 [shape = 'u32[144,128]{1,0:T(1,128)}', space=vmem, size = 0x12000, scoped, tag = 'internal scratch']
  #allocation2 [shape = 'f32[1,1]{1,0:T(1,128)S(6)}', space=smem, size = 0x200, scoped, tag = 'scoped memory for tpu_custom_call.1']
  %s0 = inlined_call_operand.<no memory space> [shape: f32[1,1], index: 0, kind: input, shape index: {}]
  %s1 = inlined_call_operand.hbm [shape: bf16[8,128], index: 1, kind: input, shape index: {}]
  %s2 = inlined_call_operand.hbm [shape: bf16[128,256], index: 2, kind: input, shape index: {}]
  %s3 = inlined_call_operand.vmem [shape: f32[1,256], index: 3, kind: input, shape index: {}]
  %s4 = inlined_call_operand.hbm [shape: bf16[256,256], index: 4, kind: input, shape index: {}]
  %s5 = inlined_call_operand.vmem [shape: f32[1,256], index: 5, kind: input, shape index: {}]
  %s6 = inlined_call_operand.hbm [shape: bf16[256,128], index: 6, kind: input, shape index: {}]
  %s7 = inlined_call_operand.vmem [shape: f32[1,128], index: 7, kind: input, shape index: {}]
  %s8 = inlined_call_operand.hbm [shape: f32[8,128], index: 8, kind: output, shape index: {}]
  %s9 = sld [smem:[#allocation0]]
  $region58: #{tpu_custom_call.1} parent=0
    _
  %s11 = ssub.s32 1, %s9
  %s12 = scalar_select 0, %s11, %s9
  %13 = sst [smem:[#allocation2]] %s0
  $region1: #{tpu_custom_call.1} parent=0
    #allocation3 [shape = 'u8[2048]{0}', space=vmem, size = 0x800, scoped, tag = 'input window, operand 1, single buffered']
    #allocation4 [shape = 's32[1]{0}', space=sflag, size = 0x4, scoped, tag = 'scoped memory for tpu_custom_call.1']
    #allocation5 [shape = 's32[1]{0}', space=sflag, size = 0x4, scoped, tag = 'scoped memory for tpu_custom_call.1']
    #allocation6 [shape = 'u8[65536]{0}', space=vmem, size = 0x10000, scoped, tag = 'input window, operand 2, single buffered']
    #allocation7 [shape = 's32[1]{0}', space=sflag, size = 0x4, scoped, tag = 'scoped memory for tpu_custom_call.1']
    #allocation8 [shape = 'u8[131072]{0}', space=vmem, size = 0x20000, scoped, tag = 'input window, operand 4, single buffered']
    #allocation9 [shape = 'u8[65536]{0}', space=vmem, size = 0x10000, scoped, tag = 'input window, operand 6, single buffered']
    #allocation10 [shape = 's32[1]{0}', space=sflag, size = 0x4, scoped, tag = 'scoped memory for tpu_custom_call.1']
    #allocation11 [shape = 'u8[4096]{0}', space=vmem, size = 0x1000, scoped, tag = 'output window, operand 0, single buffered']
    %14 = vsyncpa [#allocation4], 0
    %15 = vsyncpa [#allocation7], 0
    %16 = vsyncpa [#allocation10], 0
    %17 = vsyncpa [#allocation5], 0
    // Predicated region
    $region2: #{tpu_custom_call.1} parent=1 // pred_check
      _
    $region3: #{tpu_custom_call.1} parent=1 // pred_check_branch
      %19 = sbr.rel (0) target = $region5
    $region4: #{tpu_custom_call.1} parent=1 // pred_region
      _
    $region5: #{tpu_custom_call.1} parent=1 // pred_fallthru
      _
    // Predicated region
    $region6: #{tpu_custom_call.1} parent=1 // pred_check
      _
    $region7: #{tpu_custom_call.1} parent=1 // pred_check_branch
      %21 = sbr.rel (0) target = $region9
    $region8: #{tpu_custom_call.1} parent=1 // pred_region
      %s23 = ssub.s32 64, 64
      %24 = vsyncadd [#allocation4], %s23
      %s26 = sshll.u32 [#allocation3], 4
      %s27 = int_to_ptr.vmem [resolvable:$true] %s26
      %29 = dma.hbm_to_vmem [thread:$0]  %s1, 64, %s27, [#allocation4]
    $region9: #{tpu_custom_call.1} parent=1 // pred_fallthru
      _
    // Predicated region
    $region10: #{tpu_custom_call.1} parent=1 // pred_check
      _
    $region11: #{tpu_custom_call.1} parent=1 // pred_check_branch
      %31 = sbr.rel (0) target = $region13
    $region12: #{tpu_custom_call.1} parent=1 // pred_region
      %s33 = ssub.s32 2048, 2048
      %34 = vsyncadd [#allocation7], %s33
      %s35 = sshll.u32 [#allocation6], 4
      %s36 = int_to_ptr.vmem [resolvable:$true] %s35
      %41 = dma.hbm_to_vmem [thread:$0]  %s2, 2048, %s36, [#allocation7], 128, 128, 8
    $region13: #{tpu_custom_call.1} parent=1 // pred_fallthru
      _
    // Predicated region
    $region14: #{tpu_custom_call.1} parent=1 // pred_check
      _
    $region15: #{tpu_custom_call.1} parent=1 // pred_check_branch
      %43 = sbr.rel (0) target = $region17
    $region16: #{tpu_custom_call.1} parent=1 // pred_region
      _
    $region17: #{tpu_custom_call.1} parent=1 // pred_fallthru
      _
    // Predicated region
    $region18: #{tpu_custom_call.1} parent=1 // pred_check
      _
    $region19: #{tpu_custom_call.1} parent=1 // pred_check_branch
      %45 = sbr.rel (0) target = $region21
    $region20: #{tpu_custom_call.1} parent=1 // pred_region
      %s47 = ssub.s32 4096, 4096
      %48 = vsyncadd [#allocation7], %s47
      %s49 = sshll.u32 [#allocation8], 4
      %s50 = int_to_ptr.vmem [resolvable:$true] %s49
      %55 = dma.hbm_to_vmem [thread:$0]  %s4, 4096, %s50, [#allocation7], 128, 128, 8
    $region21: #{tpu_custom_call.1} parent=1 // pred_fallthru
      _
    // Predicated region
    $region22: #{tpu_custom_call.1} parent=1 // pred_check
      _
    $region23: #{tpu_custom_call.1} parent=1 // pred_check_branch
      %57 = sbr.rel (0) target = $region25
    $region24: #{tpu_custom_call.1} parent=1 // pred_region
      _
    $region25: #{tpu_custom_call.1} parent=1 // pred_fallthru
      _
    // Predicated region
    $region26: #{tpu_custom_call.1} parent=1 // pred_check
      _
    $region27: #{tpu_custom_call.1} parent=1 // pred_check_branch
      %59 = sbr.rel (0) target = $region29
    $region28: #{tpu_custom_call.1} parent=1 // pred_region
      %s61 = ssub.s32 2048, 2048
      %62 = vsyncadd [#allocation10], %s61
      %s63 = sshll.u32 [#allocation9], 4
      %s64 = int_to_ptr.vmem [resolvable:$true] %s63
      %69 = dma.hbm_to_vmem [thread:$0]  %s6, 2048, %s64, [#allocation10], 64, 64, 4
    $region29: #{tpu_custom_call.1} parent=1 // pred_fallthru
      _
    // Predicated region
    $region30: #{tpu_custom_call.1} parent=1 // pred_check
      _
    $region31: #{tpu_custom_call.1} parent=1 // pred_check_branch
      %71 = sbr.rel (0) target = $region33
    $region32: #{tpu_custom_call.1} parent=1 // pred_region
      _
    $region33: #{tpu_custom_call.1} parent=1 // pred_fallthru
      _
    // Predicated region
    $region34: #{tpu_custom_call.1} parent=1 // pred_check
      _
    $region35: #{tpu_custom_call.1} parent=1 // pred_check_branch
      %73 = sbr.rel (0) target = $region37
    $region36: #{tpu_custom_call.1} parent=1 // pred_region
      %74 = dma.done [#allocation4], 64
    $region37: #{tpu_custom_call.1} parent=1 // pred_fallthru
      _
    // Predicated region
    $region38: #{tpu_custom_call.1} parent=1 // pred_check
      _
    $region39: #{tpu_custom_call.1} parent=1 // pred_check_branch
      %76 = sbr.rel (0) target = $region41
    $region40: #{tpu_custom_call.1} parent=1 // pred_region
      %77 = dma.done [#allocation7], 2048
    $region41: #{tpu_custom_call.1} parent=1 // pred_fallthru
      _
    // Predicated region
    $region42: #{tpu_custom_call.1} parent=1 // pred_check
      _
    $region43: #{tpu_custom_call.1} parent=1 // pred_check_branch
      %79 = sbr.rel (0) target = $region45
    $region44: #{tpu_custom_call.1} parent=1 // pred_region
      %80 = dma.done [#allocation7], 4096
    $region45: #{tpu_custom_call.1} parent=1 // pred_fallthru
      _
    // Predicated region
    $region46: #{tpu_custom_call.1} parent=1 // pred_check
      _
    $region47: #{tpu_custom_call.1} parent=1 // pred_check_branch
      %82 = sbr.rel (0) target = $region49
    $region48: #{tpu_custom_call.1} parent=1 // pred_region
      %83 = dma.done [#allocation10], 2048
    $region49: #{tpu_custom_call.1} parent=1 // pred_fallthru
      _
    %s85 = sld [smem:[#allocation2]]
    %v86 = vld [vmem:[#allocation3] sm:$0xf]
    %v87 = vld [vmem:[#allocation6] sm:$0xff]
    %v88 = vld [vmem:[#allocation6 + $0x8] sm:$0xff]
    %v89 = vld [vmem:[#allocation6 + $0x10] sm:$0xff]
    %v90 = vld [vmem:[#allocation6 + $0x18] sm:$0xff]
    %v91 = vld [vmem:[#allocation6 + $0x20] sm:$0xff]
    %v92 = vld [vmem:[#allocation6 + $0x28] sm:$0xff]
    %v93 = vld [vmem:[#allocation6 + $0x30] sm:$0xff]
    %v94 = vld [vmem:[#allocation6 + $0x38] sm:$0xff]
    %v95 = vld [vmem:[#allocation6 + $0x40] sm:$0xff]
    %v96 = vld [vmem:[#allocation6 + $0x48] sm:$0xff]
    %v97 = vld [vmem:[#allocation6 + $0x50] sm:$0xff]
    %v98 = vld [vmem:[#allocation6 + $0x58] sm:$0xff]
    %v99 = vld [vmem:[#allocation6 + $0x60] sm:$0xff]
    %v100 = vld [vmem:[#allocation6 + $0x68] sm:$0xff]
    %v101 = vld [vmem:[#allocation6 + $0x70] sm:$0xff]
    %v102 = vld [vmem:[#allocation6 + $0x78] sm:$0xff]
    %v103 = vld [vmem:[%s3] sm:$0x3]
    %v105 = vlaneseq
    %v106 = vshrl.u32 %v105, 7
    %v107 = vsub.s32 0, %v106
    %v108 = vrot.slane %v103, %v107
    %v109 = vlaneseq
    %v110 = vshrl.u32 %v109, 7
    %v111 = vsub.s32 1, %v110
    %v112 = vrot.slane %v103, %v111
    %v131 = vunpack.c.l.b16 %v87
    %v132 = vunpack.c.h.b16 %v87
    %v133 = vunpack.c.l.b16 %v88
    %v134 = vunpack.c.h.b16 %v88
    %v135 = vunpack.c.l.b16 %v89
    %v136 = vunpack.c.h.b16 %v89
    %v137 = vunpack.c.l.b16 %v90
    %v138 = vunpack.c.h.b16 %v90
    %v139 = vunpack.c.l.b16 %v91
    %v140 = vunpack.c.h.b16 %v91
    %v141 = vunpack.c.l.b16 %v92
    %v142 = vunpack.c.h.b16 %v92
    %v143 = vunpack.c.l.b16 %v93
    %v144 = vunpack.c.h.b16 %v93
    %v145 = vunpack.c.l.b16 %v94
    %v146 = vunpack.c.h.b16 %v94
    %v147 = vunpack.c.l.b16 %v95
    %v148 = vunpack.c.h.b16 %v95
    %v149 = vunpack.c.l.b16 %v96
    %v150 = vunpack.c.h.b16 %v96
    %v151 = vunpack.c.l.b16 %v97
    %v152 = vunpack.c.h.b16 %v97
    %v153 = vunpack.c.l.b16 %v98
    %v154 = vunpack.c.h.b16 %v98
    %v155 = vunpack.c.l.b16 %v99
    %v156 = vunpack.c.h.b16 %v99
    %v157 = vunpack.c.l.b16 %v100
    %v158 = vunpack.c.h.b16 %v100
    %v159 = vunpack.c.l.b16 %v101
    %v160 = vunpack.c.h.b16 %v101
    %v161 = vunpack.c.l.b16 %v102
    %v162 = vunpack.c.h.b16 %v102
    %v163 = vpack.c.b16 %v133, %v131
    %v164 = vpack.c.b16 %v134, %v132
    %v165 = vpack.c.b16 %v137, %v135
    %v166 = vpack.c.b16 %v138, %v136
    %v167 = vpack.c.b16 %v141, %v139
    %v168 = vpack.c.b16 %v142, %v140
    %v169 = vpack.c.b16 %v145, %v143
    %v170 = vpack.c.b16 %v146, %v144
    %v171 = vpack.c.b16 %v149, %v147
    %v172 = vpack.c.b16 %v150, %v148
    %v173 = vpack.c.b16 %v153, %v151
    %v174 = vpack.c.b16 %v154, %v152
    %v175 = vpack.c.b16 %v157, %v155
    %v176 = vpack.c.b16 %v158, %v156
    %v177 = vpack.c.b16 %v161, %v159
    %v178 = vpack.c.b16 %v162, %v160
    %195 = vmatprep.subr.bf16.mxu0 %v164
    %196 = vmatpush1.bf16.msra.mxu0 %v163
    %197 = vmatprep.subr.bf16.mxu0 %v166
    %198 = vmatpush1.bf16.msra.mxu0 %v165
    %199 = vmatprep.subr.bf16.mxu0 %v168
    %200 = vmatpush1.bf16.msra.mxu0 %v167
    %201 = vmatprep.subr.bf16.mxu0 %v170
    %202 = vmatpush1.bf16.msra.mxu0 %v169
    %203 = vmatprep.subr.bf16.mxu0 %v172
    %204 = vmatpush1.bf16.msra.mxu0 %v171
    %205 = vmatprep.subr.bf16.mxu0 %v174
    %206 = vmatpush1.bf16.msra.mxu0 %v173
    %207 = vmatprep.subr.bf16.mxu0 %v176
    %208 = vmatpush1.bf16.msra.mxu0 %v175
    %209 = vmatprep.subr.bf16.mxu0 %v178
    %210 = vmatpush1.bf16.msra.mxu0 %v177
    %211 = vmatprep.subr.bf16.mxu0 0
    %212 = vmatpush1.bf16.msra.mxu0 0
    %213 = vmatprep.subr.bf16.mxu0 0
    %214 = vmatpush1.bf16.msra.mxu0 0
    %215 = vmatprep.subr.bf16.mxu0 0
    %216 = vmatpush1.bf16.msra.mxu0 0
    %217 = vmatprep.subr.bf16.mxu0 0
    %218 = vmatpush1.bf16.msra.mxu0 0
    %219 = vmatprep.subr.bf16.mxu0 0
    %220 = vmatpush1.bf16.msra.mxu0 0
    %221 = vmatprep.subr.bf16.mxu0 0
    %222 = vmatpush1.bf16.msra.mxu0 0
    %223 = vmatprep.subr.bf16.mxu0 0
    %224 = vmatpush1.bf16.msra.mxu0 0
    %225 = vmatprep.subr.bf16.mxu0 0
    %226 = vmatpush1.bf16.msra.mxu0 0
    %227 = vmatprep.mubr.bf16.mxu0 0
    %228 = vmatmul.mubr.bf16.gmra.mrb[0].mxu0 %v86
    %v229 = vpop.f32.mrb[0].mxu0
    %v230 = vadd.f32 %v108, %v229
    %v231 = vpop.f32.mrb[0].mxu0
    %v232 = vadd.f32 %v112, %v231
    %v233 = vpop.f32.mrb[0].mxu0
    %v234 = vpop.f32.mrb[0].mxu0
    %235 = vdwg.mxu0
    %v236 = vmax.f32 %v230, 0.0
    %v237 = vmax.f32 %v232, 0.0
    %v238 = vpack.c.bf16 %v236, %v236
    %v239 = vpack.c.bf16 %v237, %v237
    %v240 = vld [vmem:[#allocation8] sm:$0xff]
    %v241 = vld [vmem:[#allocation8 + $0x8] sm:$0xff]
    %v242 = vld [vmem:[#allocation8 + $0x10] sm:$0xff]
    %v243 = vld [vmem:[#allocation8 + $0x18] sm:$0xff]
    %v244 = vld [vmem:[#allocation8 + $0x20] sm:$0xff]
    %v245 = vld [vmem:[#allocation8 + $0x28] sm:$0xff]
    %v246 = vld [vmem:[#allocation8 + $0x30] sm:$0xff]
    %v247 = vld [vmem:[#allocation8 + $0x38] sm:$0xff]
    %v248 = vld [vmem:[#allocation8 + $0x40] sm:$0xff]
    %v249 = vld [vmem:[#allocation8 + $0x48] sm:$0xff]
    %v250 = vld [vmem:[#allocation8 + $0x50] sm:$0xff]
    %v251 = vld [vmem:[#allocation8 + $0x58] sm:$0xff]
    %v252 = vld [vmem:[#allocation8 + $0x60] sm:$0xff]
    %v253 = vld [vmem:[#allocation8 + $0x68] sm:$0xff]
    %v254 = vld [vmem:[#allocation8 + $0x70] sm:$0xff]
    %v255 = vld [vmem:[#allocation8 + $0x78] sm:$0xff]
    %v256 = vld [vmem:[#allocation8 + $0x80] sm:$0xff]
    %v257 = vld [vmem:[#allocation8 + $0x88] sm:$0xff]
    %v258 = vld [vmem:[#allocation8 + $0x90] sm:$0xff]
    %v259 = vld [vmem:[#allocation8 + $0x98] sm:$0xff]
    %v260 = vld [vmem:[#allocation8 + $0xa0] sm:$0xff]
    %v261 = vld [vmem:[#allocation8 + $0xa8] sm:$0xff]
    %v262 = vld [vmem:[#allocation8 + $0xb0] sm:$0xff]
    %v263 = vld [vmem:[#allocation8 + $0xb8] sm:$0xff]
    %v264 = vld [vmem:[#allocation8 + $0xc0] sm:$0xff]
    %v265 = vld [vmem:[#allocation8 + $0xc8] sm:$0xff]
    %v266 = vld [vmem:[#allocation8 + $0xd0] sm:$0xff]
    %v267 = vld [vmem:[#allocation8 + $0xd8] sm:$0xff]
    %v268 = vld [vmem:[#allocation8 + $0xe0] sm:$0xff]
    %v269 = vld [vmem:[#allocation8 + $0xe8] sm:$0xff]
    %v270 = vld [vmem:[#allocation8 + $0xf0] sm:$0xff]
    %v271 = vld [vmem:[#allocation8 + $0xf8] sm:$0xff]
    %v272 = vld [vmem:[%s5] sm:$0x3]
    %v274 = vlaneseq
    %v275 = vshrl.u32 %v274, 7
    %v276 = vsub.s32 0, %v275
    %v277 = vrot.slane %v272, %v276
    %v278 = vlaneseq
    %v279 = vshrl.u32 %v278, 7
    %v280 = vsub.s32 1, %v279
    %v281 = vrot.slane %v272, %v280
    %v316 = vunpack.c.l.b16 %v240
    %v317 = vunpack.c.h.b16 %v240
    %v318 = vunpack.c.l.b16 %v241
    %v319 = vunpack.c.h.b16 %v241
    %v320 = vunpack.c.l.b16 %v242
    %v321 = vunpack.c.h.b16 %v242
    %v322 = vunpack.c.l.b16 %v243
    %v323 = vunpack.c.h.b16 %v243
    %v324 = vunpack.c.l.b16 %v244
    %v325 = vunpack.c.h.b16 %v244
    %v326 = vunpack.c.l.b16 %v245
    %v327 = vunpack.c.h.b16 %v245
    %v328 = vunpack.c.l.b16 %v246
    %v329 = vunpack.c.h.b16 %v246
    %v330 = vunpack.c.l.b16 %v247
    %v331 = vunpack.c.h.b16 %v247
    %v332 = vunpack.c.l.b16 %v248
    %v333 = vunpack.c.h.b16 %v248
    %v334 = vunpack.c.l.b16 %v249
    %v335 = vunpack.c.h.b16 %v249
    %v336 = vunpack.c.l.b16 %v250
    %v337 = vunpack.c.h.b16 %v250
    %v338 = vunpack.c.l.b16 %v251
    %v339 = vunpack.c.h.b16 %v251
    %v340 = vunpack.c.l.b16 %v252
    %v341 = vunpack.c.h.b16 %v252
    %v342 = vunpack.c.l.b16 %v253
    %v343 = vunpack.c.h.b16 %v253
    %v344 = vunpack.c.l.b16 %v254
    %v345 = vunpack.c.h.b16 %v254
    %v346 = vunpack.c.l.b16 %v255
    %v347 = vunpack.c.h.b16 %v255
    %v348 = vunpack.c.l.b16 %v256
    %v349 = vunpack.c.h.b16 %v256
    %v350 = vunpack.c.l.b16 %v257
    %v351 = vunpack.c.h.b16 %v257
    %v352 = vunpack.c.l.b16 %v258
    %v353 = vunpack.c.h.b16 %v258
    %v354 = vunpack.c.l.b16 %v259
    %v355 = vunpack.c.h.b16 %v259
    %v356 = vunpack.c.l.b16 %v260
    %v357 = vunpack.c.h.b16 %v260
    %v358 = vunpack.c.l.b16 %v261
    %v359 = vunpack.c.h.b16 %v261
    %v360 = vunpack.c.l.b16 %v262
    %v361 = vunpack.c.h.b16 %v262
    %v362 = vunpack.c.l.b16 %v263
    %v363 = vunpack.c.h.b16 %v263
    %v364 = vunpack.c.l.b16 %v264
    %v365 = vunpack.c.h.b16 %v264
    %v366 = vunpack.c.l.b16 %v265
    %v367 = vunpack.c.h.b16 %v265
    %v368 = vunpack.c.l.b16 %v266
    %v369 = vunpack.c.h.b16 %v266
    %v370 = vunpack.c.l.b16 %v267
    %v371 = vunpack.c.h.b16 %v267
    %v372 = vunpack.c.l.b16 %v268
    %v373 = vunpack.c.h.b16 %v268
    %v374 = vunpack.c.l.b16 %v269
    %v375 = vunpack.c.h.b16 %v269
    %v376 = vunpack.c.l.b16 %v270
    %v377 = vunpack.c.h.b16 %v270
    %v378 = vunpack.c.l.b16 %v271
    %v379 = vunpack.c.h.b16 %v271
    %v380 = vpack.c.b16 %v318, %v316
    %v381 = vpack.c.b16 %v319, %v317
    %v382 = vpack.c.b16 %v322, %v320
    %v383 = vpack.c.b16 %v323, %v321
    %v384 = vpack.c.b16 %v326, %v324
    %v385 = vpack.c.b16 %v327, %v325
    %v386 = vpack.c.b16 %v330, %v328
    %v387 = vpack.c.b16 %v331, %v329
    %v388 = vpack.c.b16 %v334, %v332
    %v389 = vpack.c.b16 %v335, %v333
    %v390 = vpack.c.b16 %v338, %v336
    %v391 = vpack.c.b16 %v339, %v337
    %v392 = vpack.c.b16 %v342, %v340
    %v393 = vpack.c.b16 %v343, %v341
    %v394 = vpack.c.b16 %v346, %v344
    %v395 = vpack.c.b16 %v347, %v345
    %v396 = vpack.c.b16 %v350, %v348
    %v397 = vpack.c.b16 %v351, %v349
    %v398 = vpack.c.b16 %v354, %v352
    %v399 = vpack.c.b16 %v355, %v353
    %v400 = vpack.c.b16 %v358, %v356
    %v401 = vpack.c.b16 %v359, %v357
    %v402 = vpack.c.b16 %v362, %v360
    %v403 = vpack.c.b16 %v363, %v361
    %v404 = vpack.c.b16 %v366, %v364
    %v405 = vpack.c.b16 %v367, %v365
    %v406 = vpack.c.b16 %v370, %v368
    %v407 = vpack.c.b16 %v371, %v369
    %v408 = vpack.c.b16 %v374, %v372
    %v409 = vpack.c.b16 %v375, %v373
    %v410 = vpack.c.b16 %v378, %v376
    %v411 = vpack.c.b16 %v379, %v377
    %444 = vmatprep.subr.bf16.mxu0 %v381
    %445 = vmatpush1.bf16.msra.mxu0 %v380
    %446 = vmatprep.subr.bf16.mxu0 %v383
    %447 = vmatpush1.bf16.msra.mxu0 %v382
    %448 = vmatprep.subr.bf16.mxu0 %v385
    %449 = vmatpush1.bf16.msra.mxu0 %v384
    %450 = vmatprep.subr.bf16.mxu0 %v387
    %451 = vmatpush1.bf16.msra.mxu0 %v386
    %452 = vmatprep.subr.bf16.mxu0 %v389
    %453 = vmatpush1.bf16.msra.mxu0 %v388
    %454 = vmatprep.subr.bf16.mxu0 %v391
    %455 = vmatpush1.bf16.msra.mxu0 %v390
    %456 = vmatprep.subr.bf16.mxu0 %v393
    %457 = vmatpush1.bf16.msra.mxu0 %v392
    %458 = vmatprep.subr.bf16.mxu0 %v395
    %459 = vmatpush1.bf16.msra.mxu0 %v394
    %460 = vmatprep.subr.bf16.mxu0 %v397
    %461 = vmatpush1.bf16.msra.mxu0 %v396
    %462 = vmatprep.subr.bf16.mxu0 %v399
    %463 = vmatpush1.bf16.msra.mxu0 %v398
    %464 = vmatprep.subr.bf16.mxu0 %v401
    %465 = vmatpush1.bf16.msra.mxu0 %v400
    %466 = vmatprep.subr.bf16.mxu0 %v403
    %467 = vmatpush1.bf16.msra.mxu0 %v402
    %468 = vmatprep.subr.bf16.mxu0 %v405
    %469 = vmatpush1.bf16.msra.mxu0 %v404
    %470 = vmatprep.subr.bf16.mxu0 %v407
    %471 = vmatpush1.bf16.msra.mxu0 %v406
    %472 = vmatprep.subr.bf16.mxu0 %v409
    %473 = vmatpush1.bf16.msra.mxu0 %v408
    %474 = vmatprep.subr.bf16.mxu0 %v411
    %475 = vmatpush1.bf16.msra.mxu0 %v410
    %476 = vmatprep.mubr.bf16.mxu0 %v239
    %477 = vmatmul.mubr.bf16.gmra.mrb[0].mxu0 %v238
    %v478 = vpop.f32.mrb[0].mxu0
    %v479 = vadd.f32 %v277, %v478
    %v480 = vpop.f32.mrb[0].mxu0
    %v481 = vadd.f32 %v281, %v480
    %v482 = vpop.f32.mrb[0].mxu0
    %v483 = vpop.f32.mrb[0].mxu0
    %484 = vdwg.mxu0
    %v485 = vmax.f32 %v479, 0.0
    %v486 = vmax.f32 %v481, 0.0
    %v487 = vpack.c.bf16 %v485, %v485
    %v488 = vpack.c.bf16 %v486, %v486
    %v489 = vld [vmem:[#allocation9] sm:$0xf]
    %v490 = vld [vmem:[#allocation9 + $0x4] sm:$0xf]
    %v491 = vld [vmem:[#allocation9 + $0x8] sm:$0xf]
    %v492 = vld [vmem:[#allocation9 + $0xc] sm:$0xf]
    %v493 = vld [vmem:[#allocation9 + $0x10] sm:$0xf]
    %v494 = vld [vmem:[#allocation9 + $0x14] sm:$0xf]
    %v495 = vld [vmem:[#allocation9 + $0x18] sm:$0xf]
    %v496 = vld [vmem:[#allocation9 + $0x1c] sm:$0xf]
    %v497 = vld [vmem:[#allocation9 + $0x20] sm:$0xf]
    %v498 = vld [vmem:[#allocation9 + $0x24] sm:$0xf]
    %v499 = vld [vmem:[#allocation9 + $0x28] sm:$0xf]
    %v500 = vld [vmem:[#allocation9 + $0x2c] sm:$0xf]
    %v501 = vld [vmem:[#allocation9 + $0x30] sm:$0xf]
    %v502 = vld [vmem:[#allocation9 + $0x34] sm:$0xf]
    %v503 = vld [vmem:[#allocation9 + $0x38] sm:$0xf]
    %v504 = vld [vmem:[#allocation9 + $0x3c] sm:$0xf]
    %v505 = vld [vmem:[#allocation9 + $0x40] sm:$0xf]
    %v506 = vld [vmem:[#allocation9 + $0x44] sm:$0xf]
    %v507 = vld [vmem:[#allocation9 + $0x48] sm:$0xf]
    %v508 = vld [vmem:[#allocation9 + $0x4c] sm:$0xf]
    %v509 = vld [vmem:[#allocation9 + $0x50] sm:$0xf]
    %v510 = vld [vmem:[#allocation9 + $0x54] sm:$0xf]
    %v511 = vld [vmem:[#allocation9 + $0x58] sm:$0xf]
    %v512 = vld [vmem:[#allocation9 + $0x5c] sm:$0xf]
    %v513 = vld [vmem:[#allocation9 + $0x60] sm:$0xf]
    %v514 = vld [vmem:[#allocation9 + $0x64] sm:$0xf]
    %v515 = vld [vmem:[#allocation9 + $0x68] sm:$0xf]
    %v516 = vld [vmem:[#allocation9 + $0x6c] sm:$0xf]
    %v517 = vld [vmem:[#allocation9 + $0x70] sm:$0xf]
    %v518 = vld [vmem:[#allocation9 + $0x74] sm:$0xf]
    %v519 = vld [vmem:[#allocation9 + $0x78] sm:$0xf]
    %v520 = vld [vmem:[#allocation9 + $0x7c] sm:$0xf]
    %v521 = vld [vmem:[%s7] sm:$0x1]
    %v523 = vlaneseq
    %v524 = vshrl.u32 %v523, 7
    %v525 = vsub.s32 0, %v524
    %v526 = vrot.slane %v521, %v525
    %v560 = vunpack.c.l.b16 %v489
    %v561 = vunpack.c.l.b16 %v490
    %v562 = vunpack.c.l.b16 %v491
    %v563 = vunpack.c.l.b16 %v492
    %v564 = vunpack.c.l.b16 %v493
    %v565 = vunpack.c.l.b16 %v494
    %v566 = vunpack.c.l.b16 %v495
    %v567 = vunpack.c.l.b16 %v496
    %v568 = vunpack.c.l.b16 %v497
    %v569 = vunpack.c.l.b16 %v498
    %v570 = vunpack.c.l.b16 %v499
    %v571 = vunpack.c.l.b16 %v500
    %v572 = vunpack.c.l.b16 %v501
    %v573 = vunpack.c.l.b16 %v502
    %v574 = vunpack.c.l.b16 %v503
    %v575 = vunpack.c.l.b16 %v504
    %v576 = vunpack.c.l.b16 %v505
    %v577 = vunpack.c.l.b16 %v506
    %v578 = vunpack.c.l.b16 %v507
    %v579 = vunpack.c.l.b16 %v508
    %v580 = vunpack.c.l.b16 %v509
    %v581 = vunpack.c.l.b16 %v510
    %v582 = vunpack.c.l.b16 %v511
    %v583 = vunpack.c.l.b16 %v512
    %v584 = vunpack.c.l.b16 %v513
    %v585 = vunpack.c.l.b16 %v514
    %v586 = vunpack.c.l.b16 %v515
    %v587 = vunpack.c.l.b16 %v516
    %v588 = vunpack.c.l.b16 %v517
    %v589 = vunpack.c.l.b16 %v518
    %v590 = vunpack.c.l.b16 %v519
    %v591 = vunpack.c.l.b16 %v520
    %v592 = vpack.c.b16 %v561, %v560
    %v593 = vpack.c.b16 %v563, %v562
    %v594 = vpack.c.b16 %v565, %v564
    %v595 = vpack.c.b16 %v567, %v566
    %v596 = vpack.c.b16 %v569, %v568
    %v597 = vpack.c.b16 %v571, %v570
    %v598 = vpack.c.b16 %v573, %v572
    %v599 = vpack.c.b16 %v575, %v574
    %v600 = vpack.c.b16 %v577, %v576
    %v601 = vpack.c.b16 %v579, %v578
    %v602 = vpack.c.b16 %v581, %v580
    %v603 = vpack.c.b16 %v583, %v582
    %v604 = vpack.c.b16 %v585, %v584
    %v605 = vpack.c.b16 %v587, %v586
    %v606 = vpack.c.b16 %v589, %v588
    %v607 = vpack.c.b16 %v591, %v590
    %624 = vmatprep.subr.bf16.mxu0 0
    %625 = vmatpush1.bf16.msra.mxu0 %v592
    %626 = vmatprep.subr.bf16.mxu0 0
    %627 = vmatpush1.bf16.msra.mxu0 %v593
    %628 = vmatprep.subr.bf16.mxu0 0
    %629 = vmatpush1.bf16.msra.mxu0 %v594
    %630 = vmatprep.subr.bf16.mxu0 0
    %631 = vmatpush1.bf16.msra.mxu0 %v595
    %632 = vmatprep.subr.bf16.mxu0 0
    %633 = vmatpush1.bf16.msra.mxu0 %v596
    %634 = vmatprep.subr.bf16.mxu0 0
    %635 = vmatpush1.bf16.msra.mxu0 %v597
    %636 = vmatprep.subr.bf16.mxu0 0
    %637 = vmatpush1.bf16.msra.mxu0 %v598
    %638 = vmatprep.subr.bf16.mxu0 0
    %639 = vmatpush1.bf16.msra.mxu0 %v599
    %640 = vmatprep.subr.bf16.mxu0 0
    %641 = vmatpush1.bf16.msra.mxu0 %v600
    %642 = vmatprep.subr.bf16.mxu0 0
    %643 = vmatpush1.bf16.msra.mxu0 %v601
    %644 = vmatprep.subr.bf16.mxu0 0
    %645 = vmatpush1.bf16.msra.mxu0 %v602
    %646 = vmatprep.subr.bf16.mxu0 0
    %647 = vmatpush1.bf16.msra.mxu0 %v603
    %648 = vmatprep.subr.bf16.mxu0 0
    %649 = vmatpush1.bf16.msra.mxu0 %v604
    %650 = vmatprep.subr.bf16.mxu0 0
    %651 = vmatpush1.bf16.msra.mxu0 %v605
    %652 = vmatprep.subr.bf16.mxu0 0
    %653 = vmatpush1.bf16.msra.mxu0 %v606
    %654 = vmatprep.subr.bf16.mxu0 0
    %655 = vmatpush1.bf16.msra.mxu0 %v607
    %656 = vmatprep.mubr.bf16.mxu0 %v488
    %657 = vmatmul.mubr.bf16.gmra.mrb[0].mxu0 %v487
    %v658 = vpop.f32.mrb[0].mxu0
    %v659 = vadd.f32 %v526, %v658
    %v660 = vpop.f32.mrb[0].mxu0
    %v661 = vpop.f32.mrb[0].mxu0
    %v662 = vpop.f32.mrb[0].mxu0
    %663 = vdwg.mxu0
    %v664 = vtanh.pop %v659
    %v665 = vstv %s85
    %v666 = vmul.f32 %v665, %v664
    %667 = vst [vmem:[#allocation11] sm:$0xff] %v666
    // Predicated region
    $region50: #{tpu_custom_call.1} parent=1 // pred_check
      _
    $region51: #{tpu_custom_call.1} parent=1 // pred_check_branch
      %669 = sbr.rel (0) target = $region53
    $region52: #{tpu_custom_call.1} parent=1 // pred_region
      %s671 = ssub.s32 128, 128
      %672 = vsyncadd [#allocation5], %s671
      %s674 = sshll.u32 [#allocation11], 4
      %s675 = int_to_ptr.vmem [resolvable:$true] %s674
      %677 = dma.vmem_to_hbm [thread:$0]  %s675, 128, %s8, [#allocation5]
    $region53: #{tpu_custom_call.1} parent=1 // pred_fallthru
      _
    // Predicated region
    $region54: #{tpu_custom_call.1} parent=1 // pred_check
      _
    $region55: #{tpu_custom_call.1} parent=1 // pred_check_branch
      %679 = sbr.rel (0) target = $region57
    $region56: #{tpu_custom_call.1} parent=1 // pred_region
      %680 = dma.done [#allocation5], 128
    $region57: #{tpu_custom_call.1} parent=1 // pred_fallthru
      _
    %681 = vsyncpa [#allocation4], 1
    %682 = vsyncpa [#allocation7], 1
    %683 = vsyncpa [#allocation10], 1
    %684 = vsyncpa [#allocation5], 1

</llo_original>
